<compile_context>
chip_gen: v7x
topology: tpu7x:2x2x1
jax: 0.10.0
libtpu: 0.0.40
codegen_flags: <defaults>
</compile_context>

<pallas_src>
import functools

import jax
import jax.numpy as jnp
from jax import lax
from jax.experimental import pallas as pl
from jax.experimental.pallas import tpu as pltpu


def _upsample_nearest_kernel(x_ref, o_ref, *, sh, sw, w_out, n_rep,
                             compute_dtype, precision):
    """One row-tile of nearest-neighbour upsampling.

    x_ref: (TILE_R, W)            input rows; one row == one (n, c, h) line.
    o_ref: (TILE_R, sh * w_out)   dense 2-D output tile; the (sh, w_out) split
                                  of the last axis is merged for free in the
                                  wrapper into the H*sh / W*sw output.
    n_rep: 1  -> kernel replicates along H with sh lane-aligned slice stores.
           sh -> H replication folded into the 0/1 matrix, single full store.
    """
    w = x_ref.shape[1]
    wide_cols = n_rep * w_out

    # 0/1 replication matrix built in-kernel:
    #   rw[i, t*w_out + j] = 1  iff  j // sw == i
    # which is exactly PyTorch nearest (src = dst // scale for integer scale).
    # Written with compares (no integer div) so it lowers to plain VPU ops.
    rows_i = lax.broadcasted_iota(jnp.int32, (w, wide_cols), 0)
    cols_i = lax.broadcasted_iota(jnp.int32, (w, wide_cols), 1)
    lo0 = rows_i * sw
    cond = (cols_i >= lo0) & (cols_i < lo0 + sw)
    for t in range(1, n_rep):  # n_rep is a tiny static Python int (1 or sh)
        lo = lo0 + t * w_out
        cond = cond | ((cols_i >= lo) & (cols_i < lo + sw))
    rw = cond.astype(compute_dtype)

    x = x_ref[...].astype(compute_dtype)
    wide = jnp.dot(x, rw, precision=precision,
                   preferred_element_type=jnp.float32)
    wide = wide.astype(o_ref.dtype)  # (TILE_R, n_rep * w_out)

    if n_rep == sh:
        # Height replication already folded into rw -> one dense full store.
        o_ref[...] = wide
    else:
        # Lane-aligned (w_out % 128 == 0) dense slice stores, one per H copy.
        for k in range(sh):
            o_ref[:, k * w_out:(k + 1) * w_out] = wide


def _to_int_scale(s):
    si = int(round(float(s)))
    if abs(float(s) - si) > 1e-9 or si < 1:
        # TODO(synk): non-integer scale factors (output size = floor(in * s)).
        raise NotImplementedError("only positive integer scale factors supported")
    return si


def _round_up(v, m):
    return ((v + m - 1) // m) * m


def upsample_forward(x, scale_factor=2, mode="nearest", align_corners=None,
                     block_rows=None):
    """Forward pass of FBNet's Upsample module for NCHW inputs.

    block_rows: optional override of the row-tile size (testing / tuning).
    """
    if mode != "nearest":
        # TODO(synk): bilinear/bicubic (separable H/W weight matrices,
        # align_corners handling) are not implemented here.
        raise NotImplementedError(f"mode={mode!r} not supported (nearest only)")
    del align_corners  # ignored for nearest, as in F.interpolate

    if isinstance(scale_factor, (tuple, list)):
        sh, sw = (_to_int_scale(s) for s in scale_factor)
    else:
        sh = sw = _to_int_scale(scale_factor)

    if not jnp.issubdtype(x.dtype, jnp.floating):
        # TODO(synk): integer dtypes (would need an exact non-MXU copy path).
        raise NotImplementedError("floating-point inputs only")

    n, c, h, w = x.shape
    rows = n * c * h
    w_out = w * sw

    # Exact matmul path per dtype.
    if x.dtype == jnp.bfloat16:
        compute_dtype = jnp.bfloat16          # single MXU pass, bit-exact
        precision = None
    else:
        compute_dtype = jnp.float32           # 6-pass, bit-exact f32 pass-through
        precision = lax.Precision.HIGHEST

    # Dense-store strategy: lane-aligned slice stores when possible, otherwise
    # fold the H replication into rw and do one full-width store.
    fold_h = (sh > 1) and (w_out % 128 != 0)
    n_rep = sh if fold_h else 1

    # Row-tile selection: ~4 MiB of output per buffer, sublane-aligned,
    # balanced grid.  (No 1024-row cap.)
    itemsize = jnp.dtype(x.dtype).itemsize
    sub = max(8, 8 * (4 // itemsize))          # 8 rows f32, 16 bf16, 32 int8
    out_row_bytes = sh * w_out * itemsize
    if block_rows is None:
        tile_r = max(sub, (4 << 20) // max(1, out_row_bytes))
    else:
        tile_r = max(1, int(block_rows))
    if tile_r >= rows:
        tile_r = rows
    else:
        tile_r = max(sub, (tile_r // sub) * sub)
        steps = pl.cdiv(rows, tile_r)
        tile_r = min(tile_r, _round_up(pl.cdiv(rows, steps), sub))
    grid_steps = pl.cdiv(rows, tile_r)

    # Explicit scoped-VMEM budget: 2x(in tile) + 2x(out tile) + rw + f32 acc,
    # floor 32 MiB (v5e default is ~16 MiB), cap 48 MiB (v7x has 64 MiB).
    in_tile_b = tile_r * w * itemsize
    out_tile_b = tile_r * sh * w_out * itemsize
    rw_b = w * n_rep * w_out * jnp.dtype(compute_dtype).itemsize
    acc_b = tile_r * n_rep * w_out * 4
    needed = 2 * in_tile_b + 2 * out_tile_b + rw_b + acc_b + (2 << 20)
    vmem_limit = int(min(max(needed, 32 << 20), 48 << 20))

    kernel = functools.partial(
        _upsample_nearest_kernel, sh=sh, sw=sw, w_out=w_out, n_rep=n_rep,
        compute_dtype=compute_dtype, precision=precision)

    x2d = x.reshape(rows, w)   # free reshape (contiguous dims only)

    out2d = pl.pallas_call(
        kernel,
        out_shape=jax.ShapeDtypeStruct((rows, sh * w_out), x.dtype),
        grid=(grid_steps,),
        in_specs=[pl.BlockSpec((tile_r, w), lambda i: (i, 0))],
        out_specs=pl.BlockSpec((tile_r, sh * w_out), lambda i: (i, 0)),
        compiler_params=pltpu.CompilerParams(
            dimension_semantics=("parallel",),   # megacore sharding on v7x
            vmem_limit_bytes=vmem_limit,
        ),
    )(x2d)

    # (rows, sh*w_out) -> (n, c, h*sh, w*sw): splits/merges contiguous dims
    # only, so this reshape is free (no data movement).
    return out2d.reshape(n, c, h * sh, w_out)


if __name__ == "__main__":
    key = jax.random.PRNGKey(0)
    k1, k2 = jax.random.split(key)

    # Test 1: f32, scale 2 (FBNet's actual usage).  HIGHEST keeps f32
    # pass-through bit-exact, so we can use arbitrary f32 values.
    x1 = jax.random.normal(k1, (2, 4, 16, 16), dtype=jnp.float32)
    out1 = jax.block_until_ready(upsample_forward(x1, scale_factor=2, mode="nearest"))
    ref1 = jnp.repeat(jnp.repeat(x1, 2, axis=2), 2, axis=3)
    assert out1.shape == (2, 4, 32, 32) and out1.dtype == x1.dtype
    assert bool(jnp.array_equal(out1, ref1))

    # Test 2: bf16, asymmetric scale, odd row count (exact single-pass bf16
    # matmul path + folded-H store for a non-multiple-of-128 output width).
    x2 = jax.random.normal(k2, (1, 3, 9, 40), dtype=jnp.float32).astype(jnp.bfloat16)
    out2 = jax.block_until_ready(upsample_forward(x2, scale_factor=(2, 3), mode="nearest"))
    ref2 = jnp.repeat(jnp.repeat(x2, 2, axis=2), 3, axis=3)
    assert out2.shape == (1, 3, 18, 120) and out2.dtype == x2.dtype
    assert bool(jnp.array_equal(out2, ref2))

    # Test 3: multi-step pipelined grid with a ragged last row tile.
    out3 = jax.block_until_ready(
        upsample_forward(x1, scale_factor=2, mode="nearest", block_rows=48))
    assert bool(jnp.array_equal(out3, ref1))

    print("KERNEL_OK")
</pallas_src>

<mosaic_0001>
module attributes {stable_mosaic.version = 11 : i64} {
  func.func @_upsample_nearest_kernel(%arg0: i32, %arg1: memref<128x16xf32, #tpu.memory_space<vmem>>, %arg2: memref<128x64xf32, #tpu.memory_space<vmem>>) attributes {dimension_semantics = [#tpu.dimension_semantics<parallel>], iteration_bounds = array<i64: 1>, scalar_prefetch = 0 : i64, scratch_operands = 0 : i64, tpu.core_type = #tpu.core_type<tc>, window_params = [{transform_indices = @transform_0, window_bounds = array<i64: 128, 16>}, {transform_indices = @transform_1, window_bounds = array<i64: 128, 64>}]} {
    %0 = tpu.iota {dimensions = array<i32: 0>} : vector<16x64xi32>
    %1 = tpu.iota {dimensions = array<i32: 1>} : vector<16x64xi32>
    %c2_i32 = arith.constant 2 : i32
    %2 = vector.broadcast %c2_i32 : i32 to vector<16x64xi32>
    %3 = arith.muli %0, %2 : vector<16x64xi32>
    %4 = arith.cmpi sge, %1, %3 : vector<16x64xi32>
    %c2_i32_0 = arith.constant 2 : i32
    %5 = vector.broadcast %c2_i32_0 : i32 to vector<16x64xi32>
    %6 = arith.addi %3, %5 : vector<16x64xi32>
    %7 = arith.cmpi slt, %1, %6 : vector<16x64xi32>
    %8 = arith.andi %4, %7 : vector<16x64xi1>
    %c32_i32 = arith.constant 32 : i32
    %9 = vector.broadcast %c32_i32 : i32 to vector<16x64xi32>
    %10 = arith.addi %3, %9 : vector<16x64xi32>
    %11 = arith.cmpi sge, %1, %10 : vector<16x64xi32>
    %c2_i32_1 = arith.constant 2 : i32
    %12 = vector.broadcast %c2_i32_1 : i32 to vector<16x64xi32>
    %13 = arith.addi %10, %12 : vector<16x64xi32>
    %14 = arith.cmpi slt, %1, %13 : vector<16x64xi32>
    %15 = arith.andi %11, %14 : vector<16x64xi1>
    %16 = arith.ori %8, %15 : vector<16x64xi1>
    %17 = arith.extui %16 : vector<16x64xi1> to vector<16x64xi32>
    %18 = arith.sitofp %17 : vector<16x64xi32> to vector<16x64xf32>
    %c0 = arith.constant 0 : index
    %c0_2 = arith.constant 0 : index
    %19 = vector.load %arg1[%c0, %c0_2] : memref<128x16xf32, #tpu.memory_space<vmem>>, vector<128x16xf32>
    %cst = arith.constant dense<0.000000e+00> : vector<128x64xf32>
    %20 = tpu.matmul %19, %18, %cst {dimension_numbers = #tpu.dot_dimension_numbers<[1], [0], [0], [1], [0, 0, 1, 1], [], []>, precision = #tpu.contract_precision<fp32>} : vector<128x16xf32>, vector<16x64xf32>, vector<128x64xf32> -> vector<128x64xf32>
    %c0_3 = arith.constant 0 : index
    %c0_4 = arith.constant 0 : index
    %21 = vector.load %arg2[%c0_3, %c0_4] : memref<128x64xf32, #tpu.memory_space<vmem>>, vector<128x64xf32>
    tpu.vector_store %arg2[%c0_3, %c0_4], %20 {strides = array<i32>} : memref<128x64xf32, #tpu.memory_space<vmem>>, vector<128x64xf32>,
    return
  }
  func.func @transform_0(%arg0: i32) -> (i32, i32) {
    %c0_i32 = arith.constant 0 : i32
    %c0_i32_0 = arith.constant 0 : i32
    return %arg0, %c0_i32 : i32, i32
  }
  func.func @transform_1(%arg0: i32) -> (i32, i32) {
    %c0_i32 = arith.constant 0 : i32
    %c0_i32_0 = arith.constant 0 : i32
    return %arg0, %c0_i32 : i32, i32
  }
}

</mosaic_0001>

<llo_original>
// kernel: tpu_custom_call.1
$region0: #{tpu_custom_call.1}
  #allocation0 [shape = 'u32[]', space=smem, size = 0x4, offset = 0x4, fixed_abs, tag = 'smem constant byte address 0x4 - core index']
  #allocation1 [shape = 'u32[144,128]{1,0:T(1,128)}', space=vmem, size = 0x12000, scoped, tag = 'internal scratch']
  %s0 = inlined_call_operand.vmem [shape: f32[128,16], index: 0, kind: input, shape index: {}]
  %s1 = inlined_call_operand.vmem [shape: f32[128,64], index: 1, kind: output, shape index: {}]
  %s2 = sld [smem:[#allocation0]]
  $region14: #{tpu_custom_call.1} parent=0
    _
  %s4 = ssub.s32 1, %s2
  %s5 = scalar_select 0, %s4, %s2
  // Predicated region
  $region2: #{tpu_custom_call.1} parent=0 // pred_check
    _
  $region3: #{tpu_custom_call.1} parent=0 // pred_check_branch
    %7 = sbr.rel (0) target = $region5
  $region4: #{tpu_custom_call.1} parent=0 // pred_region
    _
  $region5: #{tpu_custom_call.1} parent=0 // pred_fallthru
    _
  %v8 = vlaneseq
  %v9 = vshrl.u32 %v8, 7
  %v10 = vadd.s32 %v9, 8
  %v11 = vlaneseq
  %v12 = vand.u32 %v11, 127
  %v13 = vmul.u32 %v9, 2
  %v14 = vmul.u32 %v10, 2
  %vm15 = vcmp.ge.s32.totalorder %v12, %v13
  %vm16 = vcmp.ge.s32.totalorder %v12, %v14
  %v17 = vadd.s32 %v13, 2
  %v18 = vadd.s32 %v14, 2
  %vm19 = vcmp.lt.s32.totalorder %v12, %v17
  %vm20 = vcmp.lt.s32.totalorder %v12, %v18
  %vm21 = vmand %vm15, %vm19
  %vm22 = vmand %vm16, %vm20
  %v23 = vadd.s32 %v13, 32
  %v24 = vadd.s32 %v14, 32
  %vm25 = vcmp.ge.s32.totalorder %v12, %v23
  %vm26 = vcmp.ge.s32.totalorder %v12, %v24
  %v27 = vadd.s32 %v23, 2
  %v28 = vadd.s32 %v24, 2
  %vm29 = vcmp.lt.s32.totalorder %v12, %v27
  %vm30 = vcmp.lt.s32.totalorder %v12, %v28
  %vm31 = vmand %vm25, %vm29
  %vm32 = vmand %vm26, %vm30
  %vm33 = vmor %vm21, %vm31
  %vm34 = vmor %vm22, %vm32
  %v35 = vsel %vm33, 1, 0
  %v36 = vsel %vm34, 1, 0
  %v37 = vcvt.s32.f32 %v35
  %v38 = vcvt.s32.f32 %v36
  %v39 = vld [vmem:[%s0] sm:$0xff]
  %v40 = vld [vmem:[%s0 + $0x8] sm:$0xff]
  %v41 = vld [vmem:[%s0 + $0x10] sm:$0xff]
  %v42 = vld [vmem:[%s0 + $0x18] sm:$0xff]
  %v43 = vld [vmem:[%s0 + $0x20] sm:$0xff]
  %v44 = vld [vmem:[%s0 + $0x28] sm:$0xff]
  %v45 = vld [vmem:[%s0 + $0x30] sm:$0xff]
  %v46 = vld [vmem:[%s0 + $0x38] sm:$0xff]
  %v47 = vld [vmem:[%s0 + $0x40] sm:$0xff]
  %v48 = vld [vmem:[%s0 + $0x48] sm:$0xff]
  %v49 = vld [vmem:[%s0 + $0x50] sm:$0xff]
  %v50 = vld [vmem:[%s0 + $0x58] sm:$0xff]
  %v51 = vld [vmem:[%s0 + $0x60] sm:$0xff]
  %v52 = vld [vmem:[%s0 + $0x68] sm:$0xff]
  %v53 = vld [vmem:[%s0 + $0x70] sm:$0xff]
  %v54 = vld [vmem:[%s0 + $0x78] sm:$0xff]
  %vm55 = vcmask 130048
  %v57 = vsel %vm55, %v39, 0
  %v60 = vsel %vm55, %v40, 0
  %v63 = vsel %vm55, %v41, 0
  %v66 = vsel %vm55, %v42, 0
  %v69 = vsel %vm55, %v43, 0
  %v72 = vsel %vm55, %v44, 0
  %v75 = vsel %vm55, %v45, 0
  %v78 = vsel %vm55, %v46, 0
  %v81 = vsel %vm55, %v47, 0
  %v84 = vsel %vm55, %v48, 0
  %v87 = vsel %vm55, %v49, 0
  %v90 = vsel %vm55, %v50, 0
  %v93 = vsel %vm55, %v51, 0
  %v96 = vsel %vm55, %v52, 0
  %v99 = vsel %vm55, %v53, 0
  %v102 = vsel %vm55, %v54, 0
  %104 = vmatprep.subr.mxu0 0.0
  %v105 = vand.u32 %v37, 4294901760
  %106 = vmatpush1.msra.mxu0 %v105
  %107 = vmatprep.subr.mxu0 0.0
  %v108 = vand.u32 %v38, 4294901760
  %109 = vmatpush1.msra.mxu0 %v108
  %110 = vmatprep.subr.mxu0 0.0
  %111 = vmatpush1.msra.mxu0 0.0
  %112 = vmatprep.subr.mxu0 0.0
  %113 = vmatpush1.msra.mxu0 0.0
  %114 = vmatprep.subr.mxu0 0.0
  %115 = vmatpush1.msra.mxu0 0.0
  %116 = vmatprep.subr.mxu0 0.0
  %117 = vmatpush1.msra.mxu0 0.0
  %118 = vmatprep.subr.mxu0 0.0
  %119 = vmatpush1.msra.mxu0 0.0
  %120 = vmatprep.subr.mxu0 0.0
  %121 = vmatpush1.msra.mxu0 0.0
  %122 = vmatprep.subr.mxu0 0.0
  %123 = vmatpush1.msra.mxu0 0.0
  %124 = vmatprep.subr.mxu0 0.0
  %125 = vmatpush1.msra.mxu0 0.0
  %126 = vmatprep.subr.mxu0 0.0
  %127 = vmatpush1.msra.mxu0 0.0
  %128 = vmatprep.subr.mxu0 0.0
  %129 = vmatpush1.msra.mxu0 0.0
  %130 = vmatprep.subr.mxu0 0.0
  %131 = vmatpush1.msra.mxu0 0.0
  %132 = vmatprep.subr.mxu0 0.0
  %133 = vmatpush1.msra.mxu0 0.0
  %134 = vmatprep.subr.mxu0 0.0
  %135 = vmatpush1.msra.mxu0 0.0
  %136 = vmatprep.subr.mxu0 0.0
  %137 = vmatpush1.msra.mxu0 0.0
  %138 = vmatprep.subr.mxu0 0.0
  %139 = vmatpush1.msra.mxu0 0.0
  %140 = vmatprep.subr.mxu0 0.0
  %141 = vmatpush1.msra.mxu0 0.0
  %142 = vmatprep.subr.mxu0 0.0
  %143 = vmatpush1.msra.mxu0 0.0
  %144 = vmatprep.subr.mxu0 0.0
  %145 = vmatpush1.msra.mxu0 0.0
  %146 = vmatprep.subr.mxu0 0.0
  %147 = vmatpush1.msra.mxu0 0.0
  %148 = vmatprep.subr.mxu0 0.0
  %149 = vmatpush1.msra.mxu0 0.0
  %150 = vmatprep.subr.mxu0 0.0
  %151 = vmatpush1.msra.mxu0 0.0
  %152 = vmatprep.subr.mxu0 0.0
  %153 = vmatpush1.msra.mxu0 0.0
  %154 = vmatprep.subr.mxu0 0.0
  %155 = vmatpush1.msra.mxu0 0.0
  %156 = vmatprep.subr.mxu0 0.0
  %157 = vmatpush1.msra.mxu0 0.0
  %158 = vmatprep.subr.mxu0 0.0
  %159 = vmatpush1.msra.mxu0 0.0
  %160 = vmatprep.subr.mxu0 0.0
  %161 = vmatpush1.msra.mxu0 0.0
  %162 = vmatprep.subr.mxu0 0.0
  %163 = vmatpush1.msra.mxu0 0.0
  %164 = vmatprep.subr.mxu0 0.0
  %165 = vmatpush1.msra.mxu0 0.0
  %166 = vmatprep.subr.mxu0 0.0
  %167 = vmatpush1.msra.mxu0 0.0
  %168 = vmatprep.subr.mxu0 0.0
  %169 = vmatpush1.msra.mxu0 0.0
  %170 = vmatprep.mubr.f32.mxu0 0.0
  %v171 = vand.u32 %v57, 4294901760
  %v172 = vsub.f32 %v57, %v171
  %v173 = vand.u32 %v172, 4294901760
  %v174 = vsub.f32 %v172, %v173
  %v175 = vand.u32 %v174, 4294901760
  %176 = vmatmul.mubr.f32.gmra.mrb[0].mxu0 %v175
  %v177 = vpop.f32.mrb[0].mxu0
  %v178 = vadd.f32 0.0, %v177
  %v179 = vpop.f32.mrb[0].mxu0
  %180 = vmatprep.mubr.f32.mxu0 0.0
  %v181 = vand.u32 %v60, 4294901760
  %v182 = vsub.f32 %v60, %v181
  %v183 = vand.u32 %v182, 4294901760
  %v184 = vsub.f32 %v182, %v183
  %v185 = vand.u32 %v184, 4294901760
  %186 = vmatmul.mubr.f32.gmra.mrb[0].mxu0 %v185
  %v187 = vpop.f32.mrb[0].mxu0
  %v188 = vadd.f32 0.0, %v187
  %v189 = vpop.f32.mrb[0].mxu0
  %190 = vmatprep.mubr.f32.mxu0 0.0
  %v191 = vand.u32 %v63, 4294901760
  %v192 = vsub.f32 %v63, %v191
  %v193 = vand.u32 %v192, 4294901760
  %v194 = vsub.f32 %v192, %v193
  %v195 = vand.u32 %v194, 4294901760
  %196 = vmatmul.mubr.f32.gmra.mrb[0].mxu0 %v195
  %v197 = vpop.f32.mrb[0].mxu0
  %v198 = vadd.f32 0.0, %v197
  %v199 = vpop.f32.mrb[0].mxu0
  %200 = vmatprep.mubr.f32.mxu0 0.0
  %v201 = vand.u32 %v66, 4294901760
  %v202 = vsub.f32 %v66, %v201
  %v203 = vand.u32 %v202, 4294901760
  %v204 = vsub.f32 %v202, %v203
  %v205 = vand.u32 %v204, 4294901760
  %206 = vmatmul.mubr.f32.gmra.mrb[0].mxu0 %v205
  %v207 = vpop.f32.mrb[0].mxu0
  %v208 = vadd.f32 0.0, %v207
  %v209 = vpop.f32.mrb[0].mxu0
  %210 = vmatprep.mubr.f32.mxu0 0.0
  %v211 = vand.u32 %v69, 4294901760
  %v212 = vsub.f32 %v69, %v211
  %v213 = vand.u32 %v212, 4294901760
  %v214 = vsub.f32 %v212, %v213
  %v215 = vand.u32 %v214, 4294901760
  %216 = vmatmul.mubr.f32.gmra.mrb[0].mxu0 %v215
  %v217 = vpop.f32.mrb[0].mxu0
  %v218 = vadd.f32 0.0, %v217
  %v219 = vpop.f32.mrb[0].mxu0
  %220 = vmatprep.mubr.f32.mxu0 0.0
  %v221 = vand.u32 %v72, 4294901760
  %v222 = vsub.f32 %v72, %v221
  %v223 = vand.u32 %v222, 4294901760
  %v224 = vsub.f32 %v222, %v223
  %v225 = vand.u32 %v224, 4294901760
  %226 = vmatmul.mubr.f32.gmra.mrb[0].mxu0 %v225
  %v227 = vpop.f32.mrb[0].mxu0
  %v228 = vadd.f32 0.0, %v227
  %v229 = vpop.f32.mrb[0].mxu0
  %230 = vmatprep.mubr.f32.mxu0 0.0
  %v231 = vand.u32 %v75, 4294901760
  %v232 = vsub.f32 %v75, %v231
  %v233 = vand.u32 %v232, 4294901760
  %v234 = vsub.f32 %v232, %v233
  %v235 = vand.u32 %v234, 4294901760
  %236 = vmatmul.mubr.f32.gmra.mrb[0].mxu0 %v235
  %v237 = vpop.f32.mrb[0].mxu0
  %v238 = vadd.f32 0.0, %v237
  %v239 = vpop.f32.mrb[0].mxu0
  %240 = vmatprep.mubr.f32.mxu0 0.0
  %v241 = vand.u32 %v78, 4294901760
  %v242 = vsub.f32 %v78, %v241
  %v243 = vand.u32 %v242, 4294901760
  %v244 = vsub.f32 %v242, %v243
  %v245 = vand.u32 %v244, 4294901760
  %246 = vmatmul.mubr.f32.gmra.mrb[0].mxu0 %v245
  %v247 = vpop.f32.mrb[0].mxu0
  %v248 = vadd.f32 0.0, %v247
  %v249 = vpop.f32.mrb[0].mxu0
  %250 = vmatprep.mubr.f32.mxu0 0.0
  %v251 = vand.u32 %v81, 4294901760
  %v252 = vsub.f32 %v81, %v251
  %v253 = vand.u32 %v252, 4294901760
  %v254 = vsub.f32 %v252, %v253
  %v255 = vand.u32 %v254, 4294901760
  %256 = vmatmul.mubr.f32.gmra.mrb[0].mxu0 %v255
  %v257 = vpop.f32.mrb[0].mxu0
  %v258 = vadd.f32 0.0, %v257
  %v259 = vpop.f32.mrb[0].mxu0
  %260 = vmatprep.mubr.f32.mxu0 0.0
  %v261 = vand.u32 %v84, 4294901760
  %v262 = vsub.f32 %v84, %v261
  %v263 = vand.u32 %v262, 4294901760
  %v264 = vsub.f32 %v262, %v263
  %v265 = vand.u32 %v264, 4294901760
  %266 = vmatmul.mubr.f32.gmra.mrb[0].mxu0 %v265
  %v267 = vpop.f32.mrb[0].mxu0
  %v268 = vadd.f32 0.0, %v267
  %v269 = vpop.f32.mrb[0].mxu0
  %270 = vmatprep.mubr.f32.mxu0 0.0
  %v271 = vand.u32 %v87, 4294901760
  %v272 = vsub.f32 %v87, %v271
  %v273 = vand.u32 %v272, 4294901760
  %v274 = vsub.f32 %v272, %v273
  %v275 = vand.u32 %v274, 4294901760
  %276 = vmatmul.mubr.f32.gmra.mrb[0].mxu0 %v275
  %v277 = vpop.f32.mrb[0].mxu0
  %v278 = vadd.f32 0.0, %v277
  %v279 = vpop.f32.mrb[0].mxu0
  %280 = vmatprep.mubr.f32.mxu0 0.0
  %v281 = vand.u32 %v90, 4294901760
  %v282 = vsub.f32 %v90, %v281
  %v283 = vand.u32 %v282, 4294901760
  %v284 = vsub.f32 %v282, %v283
  %v285 = vand.u32 %v284, 4294901760
  %286 = vmatmul.mubr.f32.gmra.mrb[0].mxu0 %v285
  %v287 = vpop.f32.mrb[0].mxu0
  %v288 = vadd.f32 0.0, %v287
  %v289 = vpop.f32.mrb[0].mxu0
  %290 = vmatprep.mubr.f32.mxu0 0.0
  %v291 = vand.u32 %v93, 4294901760
  %v292 = vsub.f32 %v93, %v291
  %v293 = vand.u32 %v292, 4294901760
  %v294 = vsub.f32 %v292, %v293
  %v295 = vand.u32 %v294, 4294901760
  %296 = vmatmul.mubr.f32.gmra.mrb[0].mxu0 %v295
  %v297 = vpop.f32.mrb[0].mxu0
  %v298 = vadd.f32 0.0, %v297
  %v299 = vpop.f32.mrb[0].mxu0
  %300 = vmatprep.mubr.f32.mxu0 0.0
  %v301 = vand.u32 %v96, 4294901760
  %v302 = vsub.f32 %v96, %v301
  %v303 = vand.u32 %v302, 4294901760
  %v304 = vsub.f32 %v302, %v303
  %v305 = vand.u32 %v304, 4294901760
  %306 = vmatmul.mubr.f32.gmra.mrb[0].mxu0 %v305
  %v307 = vpop.f32.mrb[0].mxu0
  %v308 = vadd.f32 0.0, %v307
  %v309 = vpop.f32.mrb[0].mxu0
  %310 = vmatprep.mubr.f32.mxu0 0.0
  %v311 = vand.u32 %v99, 4294901760
  %v312 = vsub.f32 %v99, %v311
  %v313 = vand.u32 %v312, 4294901760
  %v314 = vsub.f32 %v312, %v313
  %v315 = vand.u32 %v314, 4294901760
  %316 = vmatmul.mubr.f32.gmra.mrb[0].mxu0 %v315
  %v317 = vpop.f32.mrb[0].mxu0
  %v318 = vadd.f32 0.0, %v317
  %v319 = vpop.f32.mrb[0].mxu0
  %320 = vmatprep.mubr.f32.mxu0 0.0
  %v321 = vand.u32 %v102, 4294901760
  %v322 = vsub.f32 %v102, %v321
  %v323 = vand.u32 %v322, 4294901760
  %v324 = vsub.f32 %v322, %v323
  %v325 = vand.u32 %v324, 4294901760
  %326 = vmatmul.mubr.f32.gmra.mrb[0].mxu0 %v325
  %v327 = vpop.f32.mrb[0].mxu0
  %v328 = vadd.f32 0.0, %v327
  %v329 = vpop.f32.mrb[0].mxu0
  %330 = vdwg.mxu0
  %331 = vmatprep.subr.mxu0 0.0
  %v332 = vand.u32 %v37, 4294901760
  %v333 = vsub.f32 %v37, %v332
  %v334 = vand.u32 %v333, 4294901760
  %v335 = vsub.f32 %v333, %v334
  %v336 = vand.u32 %v335, 4294901760
  %337 = vmatpush1.msra.mxu0 %v336
  %338 = vmatprep.subr.mxu0 0.0
  %v339 = vand.u32 %v38, 4294901760
  %v340 = vsub.f32 %v38, %v339
  %v341 = vand.u32 %v340, 4294901760
  %v342 = vsub.f32 %v340, %v341
  %v343 = vand.u32 %v342, 4294901760
  %344 = vmatpush1.msra.mxu0 %v343
  %345 = vmatprep.subr.mxu0 0.0
  %346 = vmatpush1.msra.mxu0 0.0
  %347 = vmatprep.subr.mxu0 0.0
  %348 = vmatpush1.msra.mxu0 0.0
  %349 = vmatprep.subr.mxu0 0.0
  %350 = vmatpush1.msra.mxu0 0.0
  %351 = vmatprep.subr.mxu0 0.0
  %352 = vmatpush1.msra.mxu0 0.0
  %353 = vmatprep.subr.mxu0 0.0
  %354 = vmatpush1.msra.mxu0 0.0
  %355 = vmatprep.subr.mxu0 0.0
  %356 = vmatpush1.msra.mxu0 0.0
  %357 = vmatprep.subr.mxu0 0.0
  %358 = vmatpush1.msra.mxu0 0.0
  %359 = vmatprep.subr.mxu0 0.0
  %360 = vmatpush1.msra.mxu0 0.0
  %361 = vmatprep.subr.mxu0 0.0
  %362 = vmatpush1.msra.mxu0 0.0
  %363 = vmatprep.subr.mxu0 0.0
  %364 = vmatpush1.msra.mxu0 0.0
  %365 = vmatprep.subr.mxu0 0.0
  %366 = vmatpush1.msra.mxu0 0.0
  %367 = vmatprep.subr.mxu0 0.0
  %368 = vmatpush1.msra.mxu0 0.0
  %369 = vmatprep.subr.mxu0 0.0
  %370 = vmatpush1.msra.mxu0 0.0
  %371 = vmatprep.subr.mxu0 0.0
  %372 = vmatpush1.msra.mxu0 0.0
  %373 = vmatprep.subr.mxu0 0.0
  %374 = vmatpush1.msra.mxu0 0.0
  %375 = vmatprep.subr.mxu0 0.0
  %376 = vmatpush1.msra.mxu0 0.0
  %377 = vmatprep.subr.mxu0 0.0
  %378 = vmatpush1.msra.mxu0 0.0
  %379 = vmatprep.subr.mxu0 0.0
  %380 = vmatpush1.msra.mxu0 0.0
  %381 = vmatprep.subr.mxu0 0.0
  %382 = vmatpush1.msra.mxu0 0.0
  %383 = vmatprep.subr.mxu0 0.0
  %384 = vmatpush1.msra.mxu0 0.0
  %385 = vmatprep.subr.mxu0 0.0
  %386 = vmatpush1.msra.mxu0 0.0
  %387 = vmatprep.subr.mxu0 0.0
  %388 = vmatpush1.msra.mxu0 0.0
  %389 = vmatprep.subr.mxu0 0.0
  %390 = vmatpush1.msra.mxu0 0.0
  %391 = vmatprep.subr.mxu0 0.0
  %392 = vmatpush1.msra.mxu0 0.0
  %393 = vmatprep.subr.mxu0 0.0
  %394 = vmatpush1.msra.mxu0 0.0
  %395 = vmatprep.subr.mxu0 0.0
  %396 = vmatpush1.msra.mxu0 0.0
  %397 = vmatprep.subr.mxu0 0.0
  %398 = vmatpush1.msra.mxu0 0.0
  %399 = vmatprep.subr.mxu0 0.0
  %400 = vmatpush1.msra.mxu0 0.0
  %401 = vmatprep.subr.mxu0 0.0
  %402 = vmatpush1.msra.mxu0 0.0
  %403 = vmatprep.subr.mxu0 0.0
  %404 = vmatpush1.msra.mxu0 0.0
  %405 = vmatprep.mubr.f32.mxu0 0.0
  %v406 = vand.u32 %v57, 4294901760
  %407 = vmatmul.mubr.f32.gmra.mrb[0].mxu0 %v406
  %v408 = vpop.f32.mrb[0].mxu0
  %v409 = vadd.f32 %v178, %v408
  %v410 = vpop.f32.mrb[0].mxu0
  %411 = vmatprep.mubr.f32.mxu0 0.0
  %v412 = vand.u32 %v60, 4294901760
  %413 = vmatmul.mubr.f32.gmra.mrb[0].mxu0 %v412
  %v414 = vpop.f32.mrb[0].mxu0
  %v415 = vadd.f32 %v188, %v414
  %v416 = vpop.f32.mrb[0].mxu0
  %417 = vmatprep.mubr.f32.mxu0 0.0
  %v418 = vand.u32 %v63, 4294901760
  %419 = vmatmul.mubr.f32.gmra.mrb[0].mxu0 %v418
  %v420 = vpop.f32.mrb[0].mxu0
  %v421 = vadd.f32 %v198, %v420
  %v422 = vpop.f32.mrb[0].mxu0
  %423 = vmatprep.mubr.f32.mxu0 0.0
  %v424 = vand.u32 %v66, 4294901760
  %425 = vmatmul.mubr.f32.gmra.mrb[0].mxu0 %v424
  %v426 = vpop.f32.mrb[0].mxu0
  %v427 = vadd.f32 %v208, %v426
  %v428 = vpop.f32.mrb[0].mxu0
  %429 = vmatprep.mubr.f32.mxu0 0.0
  %v430 = vand.u32 %v69, 4294901760
  %431 = vmatmul.mubr.f32.gmra.mrb[0].mxu0 %v430
  %v432 = vpop.f32.mrb[0].mxu0
  %v433 = vadd.f32 %v218, %v432
  %v434 = vpop.f32.mrb[0].mxu0
  %435 = vmatprep.mubr.f32.mxu0 0.0
  %v436 = vand.u32 %v72, 4294901760
  %437 = vmatmul.mubr.f32.gmra.mrb[0].mxu0 %v436
  %v438 = vpop.f32.mrb[0].mxu0
  %v439 = vadd.f32 %v228, %v438
  %v440 = vpop.f32.mrb[0].mxu0
  %441 = vmatprep.mubr.f32.mxu0 0.0
  %v442 = vand.u32 %v75, 4294901760
  %443 = vmatmul.mubr.f32.gmra.mrb[0].mxu0 %v442
  %v444 = vpop.f32.mrb[0].mxu0
  %v445 = vadd.f32 %v238, %v444
  %v446 = vpop.f32.mrb[0].mxu0
  %447 = vmatprep.mubr.f32.mxu0 0.0
  %v448 = vand.u32 %v78, 4294901760
  %449 = vmatmul.mubr.f32.gmra.mrb[0].mxu0 %v448
  %v450 = vpop.f32.mrb[0].mxu0
  %v451 = vadd.f32 %v248, %v450
  %v452 = vpop.f32.mrb[0].mxu0
  %453 = vmatprep.mubr.f32.mxu0 0.0
  %v454 = vand.u32 %v81, 4294901760
  %455 = vmatmul.mubr.f32.gmra.mrb[0].mxu0 %v454
  %v456 = vpop.f32.mrb[0].mxu0
  %v457 = vadd.f32 %v258, %v456
  %v458 = vpop.f32.mrb[0].mxu0
  %459 = vmatprep.mubr.f32.mxu0 0.0
  %v460 = vand.u32 %v84, 4294901760
  %461 = vmatmul.mubr.f32.gmra.mrb[0].mxu0 %v460
  %v462 = vpop.f32.mrb[0].mxu0
  %v463 = vadd.f32 %v268, %v462
  %v464 = vpop.f32.mrb[0].mxu0
  %465 = vmatprep.mubr.f32.mxu0 0.0
  %v466 = vand.u32 %v87, 4294901760
  %467 = vmatmul.mubr.f32.gmra.mrb[0].mxu0 %v466
  %v468 = vpop.f32.mrb[0].mxu0
  %v469 = vadd.f32 %v278, %v468
  %v470 = vpop.f32.mrb[0].mxu0
  %471 = vmatprep.mubr.f32.mxu0 0.0
  %v472 = vand.u32 %v90, 4294901760
  %473 = vmatmul.mubr.f32.gmra.mrb[0].mxu0 %v472
  %v474 = vpop.f32.mrb[0].mxu0
  %v475 = vadd.f32 %v288, %v474
  %v476 = vpop.f32.mrb[0].mxu0
  %477 = vmatprep.mubr.f32.mxu0 0.0
  %v478 = vand.u32 %v93, 4294901760
  %479 = vmatmul.mubr.f32.gmra.mrb[0].mxu0 %v478
  %v480 = vpop.f32.mrb[0].mxu0
  %v481 = vadd.f32 %v298, %v480
  %v482 = vpop.f32.mrb[0].mxu0
  %483 = vmatprep.mubr.f32.mxu0 0.0
  %v484 = vand.u32 %v96, 4294901760
  %485 = vmatmul.mubr.f32.gmra.mrb[0].mxu0 %v484
  %v486 = vpop.f32.mrb[0].mxu0
  %v487 = vadd.f32 %v308, %v486
  %v488 = vpop.f32.mrb[0].mxu0
  %489 = vmatprep.mubr.f32.mxu0 0.0
  %v490 = vand.u32 %v99, 4294901760
  %491 = vmatmul.mubr.f32.gmra.mrb[0].mxu0 %v490
  %v492 = vpop.f32.mrb[0].mxu0
  %v493 = vadd.f32 %v318, %v492
  %v494 = vpop.f32.mrb[0].mxu0
  %495 = vmatprep.mubr.f32.mxu0 0.0
  %v496 = vand.u32 %v102, 4294901760
  %497 = vmatmul.mubr.f32.gmra.mrb[0].mxu0 %v496
  %v498 = vpop.f32.mrb[0].mxu0
  %v499 = vadd.f32 %v328, %v498
  %v500 = vpop.f32.mrb[0].mxu0
  %501 = vdwg.mxu0
  %502 = vmatprep.subr.mxu0 0.0
  %v503 = vand.u32 %v37, 4294901760
  %v504 = vsub.f32 %v37, %v503
  %505 = vmatpush1.msra.mxu0 %v504
  %506 = vmatprep.subr.mxu0 0.0
  %v507 = vand.u32 %v38, 4294901760
  %v508 = vsub.f32 %v38, %v507
  %509 = vmatpush1.msra.mxu0 %v508
  %510 = vmatprep.subr.mxu0 0.0
  %511 = vmatpush1.msra.mxu0 0.0
  %512 = vmatprep.subr.mxu0 0.0
  %513 = vmatpush1.msra.mxu0 0.0
  %514 = vmatprep.subr.mxu0 0.0
  %515 = vmatpush1.msra.mxu0 0.0
  %516 = vmatprep.subr.mxu0 0.0
  %517 = vmatpush1.msra.mxu0 0.0
  %518 = vmatprep.subr.mxu0 0.0
  %519 = vmatpush1.msra.mxu0 0.0
  %520 = vmatprep.subr.mxu0 0.0
  %521 = vmatpush1.msra.mxu0 0.0
  %522 = vmatprep.subr.mxu0 0.0
  %523 = vmatpush1.msra.mxu0 0.0
  %524 = vmatprep.subr.mxu0 0.0
  %525 = vmatpush1.msra.mxu0 0.0
  %526 = vmatprep.subr.mxu0 0.0
  %527 = vmatpush1.msra.mxu0 0.0
  %528 = vmatprep.subr.mxu0 0.0
  %529 = vmatpush1.msra.mxu0 0.0
  %530 = vmatprep.subr.mxu0 0.0
  %531 = vmatpush1.msra.mxu0 0.0
  %532 = vmatprep.subr.mxu0 0.0
  %533 = vmatpush1.msra.mxu0 0.0
  %534 = vmatprep.subr.mxu0 0.0
  %535 = vmatpush1.msra.mxu0 0.0
  %536 = vmatprep.subr.mxu0 0.0
  %537 = vmatpush1.msra.mxu0 0.0
  %538 = vmatprep.subr.mxu0 0.0
  %539 = vmatpush1.msra.mxu0 0.0
  %540 = vmatprep.subr.mxu0 0.0
  %541 = vmatpush1.msra.mxu0 0.0
  %542 = vmatprep.subr.mxu0 0.0
  %543 = vmatpush1.msra.mxu0 0.0
  %544 = vmatprep.subr.mxu0 0.0
  %545 = vmatpush1.msra.mxu0 0.0
  %546 = vmatprep.subr.mxu0 0.0
  %547 = vmatpush1.msra.mxu0 0.0
  %548 = vmatprep.subr.mxu0 0.0
  %549 = vmatpush1.msra.mxu0 0.0
  %550 = vmatprep.subr.mxu0 0.0
  %551 = vmatpush1.msra.mxu0 0.0
  %552 = vmatprep.subr.mxu0 0.0
  %553 = vmatpush1.msra.mxu0 0.0
  %554 = vmatprep.subr.mxu0 0.0
  %555 = vmatpush1.msra.mxu0 0.0
  %556 = vmatprep.subr.mxu0 0.0
  %557 = vmatpush1.msra.mxu0 0.0
  %558 = vmatprep.subr.mxu0 0.0
  %559 = vmatpush1.msra.mxu0 0.0
  %560 = vmatprep.subr.mxu0 0.0
  %561 = vmatpush1.msra.mxu0 0.0
  %562 = vmatprep.subr.mxu0 0.0
  %563 = vmatpush1.msra.mxu0 0.0
  %564 = vmatprep.subr.mxu0 0.0
  %565 = vmatpush1.msra.mxu0 0.0
  %566 = vmatprep.subr.mxu0 0.0
  %567 = vmatpush1.msra.mxu0 0.0
  %568 = vmatprep.subr.mxu0 0.0
  %569 = vmatpush1.msra.mxu0 0.0
  %570 = vmatprep.mubr.f32.mxu0 0.0
  %v571 = vand.u32 %v57, 4294901760
  %v572 = vsub.f32 %v57, %v571
  %573 = vmatmul.mubr.f32.gmra.mrb[0].mxu0 %v572
  %v574 = vpop.f32.mrb[0].mxu0
  %v575 = vadd.f32 %v409, %v574
  %v576 = vpop.f32.mrb[0].mxu0
  %577 = vmatprep.mubr.f32.mxu0 0.0
  %v578 = vand.u32 %v60, 4294901760
  %v579 = vsub.f32 %v60, %v578
  %580 = vmatmul.mubr.f32.gmra.mrb[0].mxu0 %v579
  %v581 = vpop.f32.mrb[0].mxu0
  %v582 = vadd.f32 %v415, %v581
  %v583 = vpop.f32.mrb[0].mxu0
  %584 = vmatprep.mubr.f32.mxu0 0.0
  %v585 = vand.u32 %v63, 4294901760
  %v586 = vsub.f32 %v63, %v585
  %587 = vmatmul.mubr.f32.gmra.mrb[0].mxu0 %v586
  %v588 = vpop.f32.mrb[0].mxu0
  %v589 = vadd.f32 %v421, %v588
  %v590 = vpop.f32.mrb[0].mxu0
  %591 = vmatprep.mubr.f32.mxu0 0.0
  %v592 = vand.u32 %v66, 4294901760
  %v593 = vsub.f32 %v66, %v592
  %594 = vmatmul.mubr.f32.gmra.mrb[0].mxu0 %v593
  %v595 = vpop.f32.mrb[0].mxu0
  %v596 = vadd.f32 %v427, %v595
  %v597 = vpop.f32.mrb[0].mxu0
  %598 = vmatprep.mubr.f32.mxu0 0.0
  %v599 = vand.u32 %v69, 4294901760
  %v600 = vsub.f32 %v69, %v599
  %601 = vmatmul.mubr.f32.gmra.mrb[0].mxu0 %v600
  %v602 = vpop.f32.mrb[0].mxu0
  %v603 = vadd.f32 %v433, %v602
  %v604 = vpop.f32.mrb[0].mxu0
  %605 = vmatprep.mubr.f32.mxu0 0.0
  %v606 = vand.u32 %v72, 4294901760
  %v607 = vsub.f32 %v72, %v606
  %608 = vmatmul.mubr.f32.gmra.mrb[0].mxu0 %v607
  %v609 = vpop.f32.mrb[0].mxu0
  %v610 = vadd.f32 %v439, %v609
  %v611 = vpop.f32.mrb[0].mxu0
  %612 = vmatprep.mubr.f32.mxu0 0.0
  %v613 = vand.u32 %v75, 4294901760
  %v614 = vsub.f32 %v75, %v613
  %615 = vmatmul.mubr.f32.gmra.mrb[0].mxu0 %v614
  %v616 = vpop.f32.mrb[0].mxu0
  %v617 = vadd.f32 %v445, %v616
  %v618 = vpop.f32.mrb[0].mxu0
  %619 = vmatprep.mubr.f32.mxu0 0.0
  %v620 = vand.u32 %v78, 4294901760
  %v621 = vsub.f32 %v78, %v620
  %622 = vmatmul.mubr.f32.gmra.mrb[0].mxu0 %v621
  %v623 = vpop.f32.mrb[0].mxu0
  %v624 = vadd.f32 %v451, %v623
  %v625 = vpop.f32.mrb[0].mxu0
  %626 = vmatprep.mubr.f32.mxu0 0.0
  %v627 = vand.u32 %v81, 4294901760
  %v628 = vsub.f32 %v81, %v627
  %629 = vmatmul.mubr.f32.gmra.mrb[0].mxu0 %v628
  %v630 = vpop.f32.mrb[0].mxu0
  %v631 = vadd.f32 %v457, %v630
  %v632 = vpop.f32.mrb[0].mxu0
  %633 = vmatprep.mubr.f32.mxu0 0.0
  %v634 = vand.u32 %v84, 4294901760
  %v635 = vsub.f32 %v84, %v634
  %636 = vmatmul.mubr.f32.gmra.mrb[0].mxu0 %v635
  %v637 = vpop.f32.mrb[0].mxu0
  %v638 = vadd.f32 %v463, %v637
  %v639 = vpop.f32.mrb[0].mxu0
  %640 = vmatprep.mubr.f32.mxu0 0.0
  %v641 = vand.u32 %v87, 4294901760
  %v642 = vsub.f32 %v87, %v641
  %643 = vmatmul.mubr.f32.gmra.mrb[0].mxu0 %v642
  %v644 = vpop.f32.mrb[0].mxu0
  %v645 = vadd.f32 %v469, %v644
  %v646 = vpop.f32.mrb[0].mxu0
  %647 = vmatprep.mubr.f32.mxu0 0.0
  %v648 = vand.u32 %v90, 4294901760
  %v649 = vsub.f32 %v90, %v648
  %650 = vmatmul.mubr.f32.gmra.mrb[0].mxu0 %v649
  %v651 = vpop.f32.mrb[0].mxu0
  %v652 = vadd.f32 %v475, %v651
  %v653 = vpop.f32.mrb[0].mxu0
  %654 = vmatprep.mubr.f32.mxu0 0.0
  %v655 = vand.u32 %v93, 4294901760
  %v656 = vsub.f32 %v93, %v655
  %657 = vmatmul.mubr.f32.gmra.mrb[0].mxu0 %v656
  %v658 = vpop.f32.mrb[0].mxu0
  %v659 = vadd.f32 %v481, %v658
  %v660 = vpop.f32.mrb[0].mxu0
  %661 = vmatprep.mubr.f32.mxu0 0.0
  %v662 = vand.u32 %v96, 4294901760
  %v663 = vsub.f32 %v96, %v662
  %664 = vmatmul.mubr.f32.gmra.mrb[0].mxu0 %v663
  %v665 = vpop.f32.mrb[0].mxu0
  %v666 = vadd.f32 %v487, %v665
  %v667 = vpop.f32.mrb[0].mxu0
  %668 = vmatprep.mubr.f32.mxu0 0.0
  %v669 = vand.u32 %v99, 4294901760
  %v670 = vsub.f32 %v99, %v669
  %671 = vmatmul.mubr.f32.gmra.mrb[0].mxu0 %v670
  %v672 = vpop.f32.mrb[0].mxu0
  %v673 = vadd.f32 %v493, %v672
  %v674 = vpop.f32.mrb[0].mxu0
  %675 = vmatprep.mubr.f32.mxu0 0.0
  %v676 = vand.u32 %v102, 4294901760
  %v677 = vsub.f32 %v102, %v676
  %678 = vmatmul.mubr.f32.gmra.mrb[0].mxu0 %v677
  %v679 = vpop.f32.mrb[0].mxu0
  %v680 = vadd.f32 %v499, %v679
  %v681 = vpop.f32.mrb[0].mxu0
  %682 = vdwg.mxu0
  %683 = vmatprep.subr.mxu0 0.0
  %v684 = vand.u32 %v37, 4294901760
  %685 = vmatpush1.msra.mxu0 %v684
  %686 = vmatprep.subr.mxu0 0.0
  %v687 = vand.u32 %v38, 4294901760
  %688 = vmatpush1.msra.mxu0 %v687
  %689 = vmatprep.subr.mxu0 0.0
  %690 = vmatpush1.msra.mxu0 0.0
  %691 = vmatprep.subr.mxu0 0.0
  %692 = vmatpush1.msra.mxu0 0.0
  %693 = vmatprep.subr.mxu0 0.0
  %694 = vmatpush1.msra.mxu0 0.0
  %695 = vmatprep.subr.mxu0 0.0
  %696 = vmatpush1.msra.mxu0 0.0
  %697 = vmatprep.subr.mxu0 0.0
  %698 = vmatpush1.msra.mxu0 0.0
  %699 = vmatprep.subr.mxu0 0.0
  %700 = vmatpush1.msra.mxu0 0.0
  %701 = vmatprep.subr.mxu0 0.0
  %702 = vmatpush1.msra.mxu0 0.0
  %703 = vmatprep.subr.mxu0 0.0
  %704 = vmatpush1.msra.mxu0 0.0
  %705 = vmatprep.subr.mxu0 0.0
  %706 = vmatpush1.msra.mxu0 0.0
  %707 = vmatprep.subr.mxu0 0.0
  %708 = vmatpush1.msra.mxu0 0.0
  %709 = vmatprep.subr.mxu0 0.0
  %710 = vmatpush1.msra.mxu0 0.0
  %711 = vmatprep.subr.mxu0 0.0
  %712 = vmatpush1.msra.mxu0 0.0
  %713 = vmatprep.subr.mxu0 0.0
  %714 = vmatpush1.msra.mxu0 0.0
  %715 = vmatprep.subr.mxu0 0.0
  %716 = vmatpush1.msra.mxu0 0.0
  %717 = vmatprep.subr.mxu0 0.0
  %718 = vmatpush1.msra.mxu0 0.0
  %719 = vmatprep.subr.mxu0 0.0
  %720 = vmatpush1.msra.mxu0 0.0
  %721 = vmatprep.subr.mxu0 0.0
  %722 = vmatpush1.msra.mxu0 0.0
  %723 = vmatprep.subr.mxu0 0.0
  %724 = vmatpush1.msra.mxu0 0.0
  %725 = vmatprep.subr.mxu0 0.0
  %726 = vmatpush1.msra.mxu0 0.0
  %727 = vmatprep.subr.mxu0 0.0
  %728 = vmatpush1.msra.mxu0 0.0
  %729 = vmatprep.subr.mxu0 0.0
  %730 = vmatpush1.msra.mxu0 0.0
  %731 = vmatprep.subr.mxu0 0.0
  %732 = vmatpush1.msra.mxu0 0.0
  %733 = vmatprep.subr.mxu0 0.0
  %734 = vmatpush1.msra.mxu0 0.0
  %735 = vmatprep.subr.mxu0 0.0
  %736 = vmatpush1.msra.mxu0 0.0
  %737 = vmatprep.subr.mxu0 0.0
  %738 = vmatpush1.msra.mxu0 0.0
  %739 = vmatprep.subr.mxu0 0.0
  %740 = vmatpush1.msra.mxu0 0.0
  %741 = vmatprep.subr.mxu0 0.0
  %742 = vmatpush1.msra.mxu0 0.0
  %743 = vmatprep.subr.mxu0 0.0
  %744 = vmatpush1.msra.mxu0 0.0
  %745 = vmatprep.subr.mxu0 0.0
  %746 = vmatpush1.msra.mxu0 0.0
  %747 = vmatprep.subr.mxu0 0.0
  %748 = vmatpush1.msra.mxu0 0.0
  %749 = vmatprep.mubr.f32.mxu0 0.0
  %v750 = vand.u32 %v57, 4294901760
  %v751 = vsub.f32 %v57, %v750
  %v752 = vand.u32 %v751, 4294901760
  %753 = vmatmul.mubr.f32.gmra.mrb[0].mxu0 %v752
  %v754 = vpop.f32.mrb[0].mxu0
  %v755 = vadd.f32 %v575, %v754
  %v756 = vpop.f32.mrb[0].mxu0
  %757 = vmatprep.mubr.f32.mxu0 0.0
  %v758 = vand.u32 %v60, 4294901760
  %v759 = vsub.f32 %v60, %v758
  %v760 = vand.u32 %v759, 4294901760
  %761 = vmatmul.mubr.f32.gmra.mrb[0].mxu0 %v760
  %v762 = vpop.f32.mrb[0].mxu0
  %v763 = vadd.f32 %v582, %v762
  %v764 = vpop.f32.mrb[0].mxu0
  %765 = vmatprep.mubr.f32.mxu0 0.0
  %v766 = vand.u32 %v63, 4294901760
  %v767 = vsub.f32 %v63, %v766
  %v768 = vand.u32 %v767, 4294901760
  %769 = vmatmul.mubr.f32.gmra.mrb[0].mxu0 %v768
  %v770 = vpop.f32.mrb[0].mxu0
  %v771 = vadd.f32 %v589, %v770
  %v772 = vpop.f32.mrb[0].mxu0
  %773 = vmatprep.mubr.f32.mxu0 0.0
  %v774 = vand.u32 %v66, 4294901760
  %v775 = vsub.f32 %v66, %v774
  %v776 = vand.u32 %v775, 4294901760
  %777 = vmatmul.mubr.f32.gmra.mrb[0].mxu0 %v776
  %v778 = vpop.f32.mrb[0].mxu0
  %v779 = vadd.f32 %v596, %v778
  %v780 = vpop.f32.mrb[0].mxu0
  %781 = vmatprep.mubr.f32.mxu0 0.0
  %v782 = vand.u32 %v69, 4294901760
  %v783 = vsub.f32 %v69, %v782
  %v784 = vand.u32 %v783, 4294901760
  %785 = vmatmul.mubr.f32.gmra.mrb[0].mxu0 %v784
  %v786 = vpop.f32.mrb[0].mxu0
  %v787 = vadd.f32 %v603, %v786
  %v788 = vpop.f32.mrb[0].mxu0
  %789 = vmatprep.mubr.f32.mxu0 0.0
  %v790 = vand.u32 %v72, 4294901760
  %v791 = vsub.f32 %v72, %v790
  %v792 = vand.u32 %v791, 4294901760
  %793 = vmatmul.mubr.f32.gmra.mrb[0].mxu0 %v792
  %v794 = vpop.f32.mrb[0].mxu0
  %v795 = vadd.f32 %v610, %v794
  %v796 = vpop.f32.mrb[0].mxu0
  %797 = vmatprep.mubr.f32.mxu0 0.0
  %v798 = vand.u32 %v75, 4294901760
  %v799 = vsub.f32 %v75, %v798
  %v800 = vand.u32 %v799, 4294901760
  %801 = vmatmul.mubr.f32.gmra.mrb[0].mxu0 %v800
  %v802 = vpop.f32.mrb[0].mxu0
  %v803 = vadd.f32 %v617, %v802
  %v804 = vpop.f32.mrb[0].mxu0
  %805 = vmatprep.mubr.f32.mxu0 0.0
  %v806 = vand.u32 %v78, 4294901760
  %v807 = vsub.f32 %v78, %v806
  %v808 = vand.u32 %v807, 4294901760
  %809 = vmatmul.mubr.f32.gmra.mrb[0].mxu0 %v808
  %v810 = vpop.f32.mrb[0].mxu0
  %v811 = vadd.f32 %v624, %v810
  %v812 = vpop.f32.mrb[0].mxu0
  %813 = vmatprep.mubr.f32.mxu0 0.0
  %v814 = vand.u32 %v81, 4294901760
  %v815 = vsub.f32 %v81, %v814
  %v816 = vand.u32 %v815, 4294901760
  %817 = vmatmul.mubr.f32.gmra.mrb[0].mxu0 %v816
  %v818 = vpop.f32.mrb[0].mxu0
  %v819 = vadd.f32 %v631, %v818
  %v820 = vpop.f32.mrb[0].mxu0
  %821 = vmatprep.mubr.f32.mxu0 0.0
  %v822 = vand.u32 %v84, 4294901760
  %v823 = vsub.f32 %v84, %v822
  %v824 = vand.u32 %v823, 4294901760
  %825 = vmatmul.mubr.f32.gmra.mrb[0].mxu0 %v824
  %v826 = vpop.f32.mrb[0].mxu0
  %v827 = vadd.f32 %v638, %v826
  %v828 = vpop.f32.mrb[0].mxu0
  %829 = vmatprep.mubr.f32.mxu0 0.0
  %v830 = vand.u32 %v87, 4294901760
  %v831 = vsub.f32 %v87, %v830
  %v832 = vand.u32 %v831, 4294901760
  %833 = vmatmul.mubr.f32.gmra.mrb[0].mxu0 %v832
  %v834 = vpop.f32.mrb[0].mxu0
  %v835 = vadd.f32 %v645, %v834
  %v836 = vpop.f32.mrb[0].mxu0
  %837 = vmatprep.mubr.f32.mxu0 0.0
  %v838 = vand.u32 %v90, 4294901760
  %v839 = vsub.f32 %v90, %v838
  %v840 = vand.u32 %v839, 4294901760
  %841 = vmatmul.mubr.f32.gmra.mrb[0].mxu0 %v840
  %v842 = vpop.f32.mrb[0].mxu0
  %v843 = vadd.f32 %v652, %v842
  %v844 = vpop.f32.mrb[0].mxu0
  %845 = vmatprep.mubr.f32.mxu0 0.0
  %v846 = vand.u32 %v93, 4294901760
  %v847 = vsub.f32 %v93, %v846
  %v848 = vand.u32 %v847, 4294901760
  %849 = vmatmul.mubr.f32.gmra.mrb[0].mxu0 %v848
  %v850 = vpop.f32.mrb[0].mxu0
  %v851 = vadd.f32 %v659, %v850
  %v852 = vpop.f32.mrb[0].mxu0
  %853 = vmatprep.mubr.f32.mxu0 0.0
  %v854 = vand.u32 %v96, 4294901760
  %v855 = vsub.f32 %v96, %v854
  %v856 = vand.u32 %v855, 4294901760
  %857 = vmatmul.mubr.f32.gmra.mrb[0].mxu0 %v856
  %v858 = vpop.f32.mrb[0].mxu0
  %v859 = vadd.f32 %v666, %v858
  %v860 = vpop.f32.mrb[0].mxu0
  %861 = vmatprep.mubr.f32.mxu0 0.0
  %v862 = vand.u32 %v99, 4294901760
  %v863 = vsub.f32 %v99, %v862
  %v864 = vand.u32 %v863, 4294901760
  %865 = vmatmul.mubr.f32.gmra.mrb[0].mxu0 %v864
  %v866 = vpop.f32.mrb[0].mxu0
  %v867 = vadd.f32 %v673, %v866
  %v868 = vpop.f32.mrb[0].mxu0
  %869 = vmatprep.mubr.f32.mxu0 0.0
  %v870 = vand.u32 %v102, 4294901760
  %v871 = vsub.f32 %v102, %v870
  %v872 = vand.u32 %v871, 4294901760
  %873 = vmatmul.mubr.f32.gmra.mrb[0].mxu0 %v872
  %v874 = vpop.f32.mrb[0].mxu0
  %v875 = vadd.f32 %v680, %v874
  %v876 = vpop.f32.mrb[0].mxu0
  %877 = vdwg.mxu0
  %878 = vmatprep.subr.mxu0 0.0
  %v879 = vand.u32 %v37, 4294901760
  %v880 = vsub.f32 %v37, %v879
  %v881 = vand.u32 %v880, 4294901760
  %882 = vmatpush1.msra.mxu0 %v881
  %883 = vmatprep.subr.mxu0 0.0
  %v884 = vand.u32 %v38, 4294901760
  %v885 = vsub.f32 %v38, %v884
  %v886 = vand.u32 %v885, 4294901760
  %887 = vmatpush1.msra.mxu0 %v886
  %888 = vmatprep.subr.mxu0 0.0
  %889 = vmatpush1.msra.mxu0 0.0
  %890 = vmatprep.subr.mxu0 0.0
  %891 = vmatpush1.msra.mxu0 0.0
  %892 = vmatprep.subr.mxu0 0.0
  %893 = vmatpush1.msra.mxu0 0.0
  %894 = vmatprep.subr.mxu0 0.0
  %895 = vmatpush1.msra.mxu0 0.0
  %896 = vmatprep.subr.mxu0 0.0
  %897 = vmatpush1.msra.mxu0 0.0
  %898 = vmatprep.subr.mxu0 0.0
  %899 = vmatpush1.msra.mxu0 0.0
  %900 = vmatprep.subr.mxu0 0.0
  %901 = vmatpush1.msra.mxu0 0.0
  %902 = vmatprep.subr.mxu0 0.0
  %903 = vmatpush1.msra.mxu0 0.0
  %904 = vmatprep.subr.mxu0 0.0
  %905 = vmatpush1.msra.mxu0 0.0
  %906 = vmatprep.subr.mxu0 0.0
  %907 = vmatpush1.msra.mxu0 0.0
  %908 = vmatprep.subr.mxu0 0.0
  %909 = vmatpush1.msra.mxu0 0.0
  %910 = vmatprep.subr.mxu0 0.0
  %911 = vmatpush1.msra.mxu0 0.0
  %912 = vmatprep.subr.mxu0 0.0
  %913 = vmatpush1.msra.mxu0 0.0
  %914 = vmatprep.subr.mxu0 0.0
  %915 = vmatpush1.msra.mxu0 0.0
  %916 = vmatprep.subr.mxu0 0.0
  %917 = vmatpush1.msra.mxu0 0.0
  %918 = vmatprep.subr.mxu0 0.0
  %919 = vmatpush1.msra.mxu0 0.0
  %920 = vmatprep.subr.mxu0 0.0
  %921 = vmatpush1.msra.mxu0 0.0
  %922 = vmatprep.subr.mxu0 0.0
  %923 = vmatpush1.msra.mxu0 0.0
  %924 = vmatprep.subr.mxu0 0.0
  %925 = vmatpush1.msra.mxu0 0.0
  %926 = vmatprep.subr.mxu0 0.0
  %927 = vmatpush1.msra.mxu0 0.0
  %928 = vmatprep.subr.mxu0 0.0
  %929 = vmatpush1.msra.mxu0 0.0
  %930 = vmatprep.subr.mxu0 0.0
  %931 = vmatpush1.msra.mxu0 0.0
  %932 = vmatprep.subr.mxu0 0.0
  %933 = vmatpush1.msra.mxu0 0.0
  %934 = vmatprep.subr.mxu0 0.0
  %935 = vmatpush1.msra.mxu0 0.0
  %936 = vmatprep.subr.mxu0 0.0
  %937 = vmatpush1.msra.mxu0 0.0
  %938 = vmatprep.subr.mxu0 0.0
  %939 = vmatpush1.msra.mxu0 0.0
  %940 = vmatprep.subr.mxu0 0.0
  %941 = vmatpush1.msra.mxu0 0.0
  %942 = vmatprep.subr.mxu0 0.0
  %943 = vmatpush1.msra.mxu0 0.0
  %944 = vmatprep.subr.mxu0 0.0
  %945 = vmatpush1.msra.mxu0 0.0
  %946 = vmatprep.subr.mxu0 0.0
  %947 = vmatpush1.msra.mxu0 0.0
  %948 = vmatprep.mubr.f32.mxu0 0.0
  %v949 = vand.u32 %v57, 4294901760
  %950 = vmatmul.mubr.f32.gmra.mrb[0].mxu0 %v949
  %v951 = vpop.f32.mrb[0].mxu0
  %v952 = vadd.f32 %v755, %v951
  %v953 = vpop.f32.mrb[0].mxu0
  %954 = vmatprep.mubr.f32.mxu0 0.0
  %v955 = vand.u32 %v60, 4294901760
  %956 = vmatmul.mubr.f32.gmra.mrb[0].mxu0 %v955
  %v957 = vpop.f32.mrb[0].mxu0
  %v958 = vadd.f32 %v763, %v957
  %v959 = vpop.f32.mrb[0].mxu0
  %960 = vmatprep.mubr.f32.mxu0 0.0
  %v961 = vand.u32 %v63, 4294901760
  %962 = vmatmul.mubr.f32.gmra.mrb[0].mxu0 %v961
  %v963 = vpop.f32.mrb[0].mxu0
  %v964 = vadd.f32 %v771, %v963
  %v965 = vpop.f32.mrb[0].mxu0
  %966 = vmatprep.mubr.f32.mxu0 0.0
  %v967 = vand.u32 %v66, 4294901760
  %968 = vmatmul.mubr.f32.gmra.mrb[0].mxu0 %v967
  %v969 = vpop.f32.mrb[0].mxu0
  %v970 = vadd.f32 %v779, %v969
  %v971 = vpop.f32.mrb[0].mxu0
  %972 = vmatprep.mubr.f32.mxu0 0.0
  %v973 = vand.u32 %v69, 4294901760
  %974 = vmatmul.mubr.f32.gmra.mrb[0].mxu0 %v973
  %v975 = vpop.f32.mrb[0].mxu0
  %v976 = vadd.f32 %v787, %v975
  %v977 = vpop.f32.mrb[0].mxu0
  %978 = vmatprep.mubr.f32.mxu0 0.0
  %v979 = vand.u32 %v72, 4294901760
  %980 = vmatmul.mubr.f32.gmra.mrb[0].mxu0 %v979
  %v981 = vpop.f32.mrb[0].mxu0
  %v982 = vadd.f32 %v795, %v981
  %v983 = vpop.f32.mrb[0].mxu0
  %984 = vmatprep.mubr.f32.mxu0 0.0
  %v985 = vand.u32 %v75, 4294901760
  %986 = vmatmul.mubr.f32.gmra.mrb[0].mxu0 %v985
  %v987 = vpop.f32.mrb[0].mxu0
  %v988 = vadd.f32 %v803, %v987
  %v989 = vpop.f32.mrb[0].mxu0
  %990 = vmatprep.mubr.f32.mxu0 0.0
  %v991 = vand.u32 %v78, 4294901760
  %992 = vmatmul.mubr.f32.gmra.mrb[0].mxu0 %v991
  %v993 = vpop.f32.mrb[0].mxu0
  %v994 = vadd.f32 %v811, %v993
  %v995 = vpop.f32.mrb[0].mxu0
  %996 = vmatprep.mubr.f32.mxu0 0.0
  %v997 = vand.u32 %v81, 4294901760
  %998 = vmatmul.mubr.f32.gmra.mrb[0].mxu0 %v997
  %v999 = vpop.f32.mrb[0].mxu0
  %v1000 = vadd.f32 %v819, %v999
  %v1001 = vpop.f32.mrb[0].mxu0
  %1002 = vmatprep.mubr.f32.mxu0 0.0
  %v1003 = vand.u32 %v84, 4294901760
  %1004 = vmatmul.mubr.f32.gmra.mrb[0].mxu0 %v1003
  %v1005 = vpop.f32.mrb[0].mxu0
  %v1006 = vadd.f32 %v827, %v1005
  %v1007 = vpop.f32.mrb[0].mxu0
  %1008 = vmatprep.mubr.f32.mxu0 0.0
  %v1009 = vand.u32 %v87, 4294901760
  %1010 = vmatmul.mubr.f32.gmra.mrb[0].mxu0 %v1009
  %v1011 = vpop.f32.mrb[0].mxu0
  %v1012 = vadd.f32 %v835, %v1011
  %v1013 = vpop.f32.mrb[0].mxu0
  %1014 = vmatprep.mubr.f32.mxu0 0.0
  %v1015 = vand.u32 %v90, 4294901760
  %1016 = vmatmul.mubr.f32.gmra.mrb[0].mxu0 %v1015
  %v1017 = vpop.f32.mrb[0].mxu0
  %v1018 = vadd.f32 %v843, %v1017
  %v1019 = vpop.f32.mrb[0].mxu0
  %1020 = vmatprep.mubr.f32.mxu0 0.0
  %v1021 = vand.u32 %v93, 4294901760
  %1022 = vmatmul.mubr.f32.gmra.mrb[0].mxu0 %v1021
  %v1023 = vpop.f32.mrb[0].mxu0
  %v1024 = vadd.f32 %v851, %v1023
  %v1025 = vpop.f32.mrb[0].mxu0
  %1026 = vmatprep.mubr.f32.mxu0 0.0
  %v1027 = vand.u32 %v96, 4294901760
  %1028 = vmatmul.mubr.f32.gmra.mrb[0].mxu0 %v1027
  %v1029 = vpop.f32.mrb[0].mxu0
  %v1030 = vadd.f32 %v859, %v1029
  %v1031 = vpop.f32.mrb[0].mxu0
  %1032 = vmatprep.mubr.f32.mxu0 0.0
  %v1033 = vand.u32 %v99, 4294901760
  %1034 = vmatmul.mubr.f32.gmra.mrb[0].mxu0 %v1033
  %v1035 = vpop.f32.mrb[0].mxu0
  %v1036 = vadd.f32 %v867, %v1035
  %v1037 = vpop.f32.mrb[0].mxu0
  %1038 = vmatprep.mubr.f32.mxu0 0.0
  %v1039 = vand.u32 %v102, 4294901760
  %1040 = vmatmul.mubr.f32.gmra.mrb[0].mxu0 %v1039
  %v1041 = vpop.f32.mrb[0].mxu0
  %v1042 = vadd.f32 %v875, %v1041
  %v1043 = vpop.f32.mrb[0].mxu0
  %1044 = vdwg.mxu0
  %1045 = vmatprep.subr.mxu0 0.0
  %v1046 = vand.u32 %v37, 4294901760
  %1047 = vmatpush1.msra.mxu0 %v1046
  %1048 = vmatprep.subr.mxu0 0.0
  %v1049 = vand.u32 %v38, 4294901760
  %1050 = vmatpush1.msra.mxu0 %v1049
  %1051 = vmatprep.subr.mxu0 0.0
  %1052 = vmatpush1.msra.mxu0 0.0
  %1053 = vmatprep.subr.mxu0 0.0
  %1054 = vmatpush1.msra.mxu0 0.0
  %1055 = vmatprep.subr.mxu0 0.0
  %1056 = vmatpush1.msra.mxu0 0.0
  %1057 = vmatprep.subr.mxu0 0.0
  %1058 = vmatpush1.msra.mxu0 0.0
  %1059 = vmatprep.subr.mxu0 0.0
  %1060 = vmatpush1.msra.mxu0 0.0
  %1061 = vmatprep.subr.mxu0 0.0
  %1062 = vmatpush1.msra.mxu0 0.0
  %1063 = vmatprep.subr.mxu0 0.0
  %1064 = vmatpush1.msra.mxu0 0.0
  %1065 = vmatprep.subr.mxu0 0.0
  %1066 = vmatpush1.msra.mxu0 0.0
  %1067 = vmatprep.subr.mxu0 0.0
  %1068 = vmatpush1.msra.mxu0 0.0
  %1069 = vmatprep.subr.mxu0 0.0
  %1070 = vmatpush1.msra.mxu0 0.0
  %1071 = vmatprep.subr.mxu0 0.0
  %1072 = vmatpush1.msra.mxu0 0.0
  %1073 = vmatprep.subr.mxu0 0.0
  %1074 = vmatpush1.msra.mxu0 0.0
  %1075 = vmatprep.subr.mxu0 0.0
  %1076 = vmatpush1.msra.mxu0 0.0
  %1077 = vmatprep.subr.mxu0 0.0
  %1078 = vmatpush1.msra.mxu0 0.0
  %1079 = vmatprep.subr.mxu0 0.0
  %1080 = vmatpush1.msra.mxu0 0.0
  %1081 = vmatprep.subr.mxu0 0.0
  %1082 = vmatpush1.msra.mxu0 0.0
  %1083 = vmatprep.subr.mxu0 0.0
  %1084 = vmatpush1.msra.mxu0 0.0
  %1085 = vmatprep.subr.mxu0 0.0
  %1086 = vmatpush1.msra.mxu0 0.0
  %1087 = vmatprep.subr.mxu0 0.0
  %1088 = vmatpush1.msra.mxu0 0.0
  %1089 = vmatprep.subr.mxu0 0.0
  %1090 = vmatpush1.msra.mxu0 0.0
  %1091 = vmatprep.subr.mxu0 0.0
  %1092 = vmatpush1.msra.mxu0 0.0
  %1093 = vmatprep.subr.mxu0 0.0
  %1094 = vmatpush1.msra.mxu0 0.0
  %1095 = vmatprep.subr.mxu0 0.0
  %1096 = vmatpush1.msra.mxu0 0.0
  %1097 = vmatprep.subr.mxu0 0.0
  %1098 = vmatpush1.msra.mxu0 0.0
  %1099 = vmatprep.subr.mxu0 0.0
  %1100 = vmatpush1.msra.mxu0 0.0
  %1101 = vmatprep.subr.mxu0 0.0
  %1102 = vmatpush1.msra.mxu0 0.0
  %1103 = vmatprep.subr.mxu0 0.0
  %1104 = vmatpush1.msra.mxu0 0.0
  %1105 = vmatprep.subr.mxu0 0.0
  %1106 = vmatpush1.msra.mxu0 0.0
  %1107 = vmatprep.subr.mxu0 0.0
  %1108 = vmatpush1.msra.mxu0 0.0
  %1109 = vmatprep.subr.mxu0 0.0
  %1110 = vmatpush1.msra.mxu0 0.0
  %1111 = vmatprep.mubr.f32.mxu0 0.0
  %v1112 = vand.u32 %v57, 4294901760
  %1113 = vmatmul.mubr.f32.gmra.mrb[0].mxu0 %v1112
  %v1114 = vpop.f32.mrb[0].mxu0
  %v1115 = vadd.f32 %v952, %v1114
  %v1116 = vpop.f32.mrb[0].mxu0
  %1117 = vmatprep.mubr.f32.mxu0 0.0
  %v1118 = vand.u32 %v60, 4294901760
  %1119 = vmatmul.mubr.f32.gmra.mrb[0].mxu0 %v1118
  %v1120 = vpop.f32.mrb[0].mxu0
  %v1121 = vadd.f32 %v958, %v1120
  %v1122 = vpop.f32.mrb[0].mxu0
  %1123 = vmatprep.mubr.f32.mxu0 0.0
  %v1124 = vand.u32 %v63, 4294901760
  %1125 = vmatmul.mubr.f32.gmra.mrb[0].mxu0 %v1124
  %v1126 = vpop.f32.mrb[0].mxu0
  %v1127 = vadd.f32 %v964, %v1126
  %v1128 = vpop.f32.mrb[0].mxu0
  %1129 = vmatprep.mubr.f32.mxu0 0.0
  %v1130 = vand.u32 %v66, 4294901760
  %1131 = vmatmul.mubr.f32.gmra.mrb[0].mxu0 %v1130
  %v1132 = vpop.f32.mrb[0].mxu0
  %v1133 = vadd.f32 %v970, %v1132
  %v1134 = vpop.f32.mrb[0].mxu0
  %1135 = vmatprep.mubr.f32.mxu0 0.0
  %v1136 = vand.u32 %v69, 4294901760
  %1137 = vmatmul.mubr.f32.gmra.mrb[0].mxu0 %v1136
  %v1138 = vpop.f32.mrb[0].mxu0
  %v1139 = vadd.f32 %v976, %v1138
  %v1140 = vpop.f32.mrb[0].mxu0
  %1141 = vmatprep.mubr.f32.mxu0 0.0
  %v1142 = vand.u32 %v72, 4294901760
  %1143 = vmatmul.mubr.f32.gmra.mrb[0].mxu0 %v1142
  %v1144 = vpop.f32.mrb[0].mxu0
  %v1145 = vadd.f32 %v982, %v1144
  %v1146 = vpop.f32.mrb[0].mxu0
  %1147 = vmatprep.mubr.f32.mxu0 0.0
  %v1148 = vand.u32 %v75, 4294901760
  %1149 = vmatmul.mubr.f32.gmra.mrb[0].mxu0 %v1148
  %v1150 = vpop.f32.mrb[0].mxu0
  %v1151 = vadd.f32 %v988, %v1150
  %v1152 = vpop.f32.mrb[0].mxu0
  %1153 = vmatprep.mubr.f32.mxu0 0.0
  %v1154 = vand.u32 %v78, 4294901760
  %1155 = vmatmul.mubr.f32.gmra.mrb[0].mxu0 %v1154
  %v1156 = vpop.f32.mrb[0].mxu0
  %v1157 = vadd.f32 %v994, %v1156
  %v1158 = vpop.f32.mrb[0].mxu0
  %1159 = vmatprep.mubr.f32.mxu0 0.0
  %v1160 = vand.u32 %v81, 4294901760
  %1161 = vmatmul.mubr.f32.gmra.mrb[0].mxu0 %v1160
  %v1162 = vpop.f32.mrb[0].mxu0
  %v1163 = vadd.f32 %v1000, %v1162
  %v1164 = vpop.f32.mrb[0].mxu0
  %1165 = vmatprep.mubr.f32.mxu0 0.0
  %v1166 = vand.u32 %v84, 4294901760
  %1167 = vmatmul.mubr.f32.gmra.mrb[0].mxu0 %v1166
  %v1168 = vpop.f32.mrb[0].mxu0
  %v1169 = vadd.f32 %v1006, %v1168
  %v1170 = vpop.f32.mrb[0].mxu0
  %1171 = vmatprep.mubr.f32.mxu0 0.0
  %v1172 = vand.u32 %v87, 4294901760
  %1173 = vmatmul.mubr.f32.gmra.mrb[0].mxu0 %v1172
  %v1174 = vpop.f32.mrb[0].mxu0
  %v1175 = vadd.f32 %v1012, %v1174
  %v1176 = vpop.f32.mrb[0].mxu0
  %1177 = vmatprep.mubr.f32.mxu0 0.0
  %v1178 = vand.u32 %v90, 4294901760
  %1179 = vmatmul.mubr.f32.gmra.mrb[0].mxu0 %v1178
  %v1180 = vpop.f32.mrb[0].mxu0
  %v1181 = vadd.f32 %v1018, %v1180
  %v1182 = vpop.f32.mrb[0].mxu0
  %1183 = vmatprep.mubr.f32.mxu0 0.0
  %v1184 = vand.u32 %v93, 4294901760
  %1185 = vmatmul.mubr.f32.gmra.mrb[0].mxu0 %v1184
  %v1186 = vpop.f32.mrb[0].mxu0
  %v1187 = vadd.f32 %v1024, %v1186
  %v1188 = vpop.f32.mrb[0].mxu0
  %1189 = vmatprep.mubr.f32.mxu0 0.0
  %v1190 = vand.u32 %v96, 4294901760
  %1191 = vmatmul.mubr.f32.gmra.mrb[0].mxu0 %v1190
  %v1192 = vpop.f32.mrb[0].mxu0
  %v1193 = vadd.f32 %v1030, %v1192
  %v1194 = vpop.f32.mrb[0].mxu0
  %1195 = vmatprep.mubr.f32.mxu0 0.0
  %v1196 = vand.u32 %v99, 4294901760
  %1197 = vmatmul.mubr.f32.gmra.mrb[0].mxu0 %v1196
  %v1198 = vpop.f32.mrb[0].mxu0
  %v1199 = vadd.f32 %v1036, %v1198
  %v1200 = vpop.f32.mrb[0].mxu0
  %1201 = vmatprep.mubr.f32.mxu0 0.0
  %v1202 = vand.u32 %v102, 4294901760
  %1203 = vmatmul.mubr.f32.gmra.mrb[0].mxu0 %v1202
  %v1204 = vpop.f32.mrb[0].mxu0
  %v1205 = vadd.f32 %v1042, %v1204
  %v1206 = vpop.f32.mrb[0].mxu0
  %1207 = vdwg.mxu0
  %vm1208 = vcmask 523264
  %1209 = vst.msk [vmem:[%s1] sm:$0xff] %vm1208, %v1115
  %1210 = vst.msk [vmem:[%s1 + $0x8] sm:$0xff] %vm1208, %v1121
  %1211 = vst.msk [vmem:[%s1 + $0x10] sm:$0xff] %vm1208, %v1127
  %1212 = vst.msk [vmem:[%s1 + $0x18] sm:$0xff] %vm1208, %v1133
  %1213 = vst.msk [vmem:[%s1 + $0x20] sm:$0xff] %vm1208, %v1139
  %1214 = vst.msk [vmem:[%s1 + $0x28] sm:$0xff] %vm1208, %v1145
  %1215 = vst.msk [vmem:[%s1 + $0x30] sm:$0xff] %vm1208, %v1151
  %1216 = vst.msk [vmem:[%s1 + $0x38] sm:$0xff] %vm1208, %v1157
  %1217 = vst.msk [vmem:[%s1 + $0x40] sm:$0xff] %vm1208, %v1163
  %1218 = vst.msk [vmem:[%s1 + $0x48] sm:$0xff] %vm1208, %v1169
  %1219 = vst.msk [vmem:[%s1 + $0x50] sm:$0xff] %vm1208, %v1175
  %1220 = vst.msk [vmem:[%s1 + $0x58] sm:$0xff] %vm1208, %v1181
  %1221 = vst.msk [vmem:[%s1 + $0x60] sm:$0xff] %vm1208, %v1187
  %1222 = vst.msk [vmem:[%s1 + $0x68] sm:$0xff] %vm1208, %v1193
  %1223 = vst.msk [vmem:[%s1 + $0x70] sm:$0xff] %vm1208, %v1199
  %1224 = vst.msk [vmem:[%s1 + $0x78] sm:$0xff] %vm1208, %v1205
  // Predicated region
  $region6: #{tpu_custom_call.1} parent=0 // pred_check
    _
  $region7: #{tpu_custom_call.1} parent=0 // pred_check_branch
    %1226 = sbr.rel (0) target = $region9
  $region8: #{tpu_custom_call.1} parent=0 // pred_region
    _
  $region9: #{tpu_custom_call.1} parent=0 // pred_fallthru
    _
  // Predicated region
  $region10: #{tpu_custom_call.1} parent=0 // pred_check
    _
  $region11: #{tpu_custom_call.1} parent=0 // pred_check_branch
    %1228 = sbr.rel (0) target = $region13
  $region12: #{tpu_custom_call.1} parent=0 // pred_region
    _
  $region13: #{tpu_custom_call.1} parent=0 // pred_fallthru
    _

</llo_original>
